<compile_context>
chip_gen: v7x
topology: tpu7x:2x2x1
jax: 0.10.0
libtpu: 0.0.40
codegen_flags: <defaults>
</compile_context>

<pallas_src>
import functools

import jax
import jax.numpy as jnp
import numpy as np
from jax.experimental import pallas as pl
from jax.experimental.pallas import tpu as pltpu


def _loss2_kernel(t_ref, p_ref, out_ref, *, n_rows, tile_n, need_mask):
    t = t_ref[...].astype(jnp.float32)
    p = p_ref[...].astype(jnp.float32)
    d = t - p
    v = d * d + jnp.abs(d)          # fused |d| + d^2, single reduce below
    if need_mask:
        # Zero out rows past the true end of the array in the ragged tail block.
        row = jax.lax.broadcasted_iota(jnp.int32, (tile_n, 1), 0)
        valid = (pl.program_id(0) * tile_n + row) < n_rows
        v = jnp.where(valid, v, jnp.float32(0.0))
    out_ref[0, 0] = jnp.sum(v)


def loss2_pallas(truth, pred, *, target_block_bytes=2 * 1024 * 1024):
    assert truth.shape == pred.shape and truth.ndim == 5
    B, T = truth.shape[0], truth.shape[1]
    N = B * T
    D = int(np.prod(truth.shape[2:]))

    # Native-dtype 2-D views; no pad, no upcast on the host.
    t2 = truth.reshape(N, D)
    p2 = pred.reshape(N, D)

    itemsize = jnp.dtype(truth.dtype).itemsize
    bytes_per_row = max(1, D * itemsize)
    rows_target = max(1, target_block_bytes // bytes_per_row)
    if rows_target >= N:
        tile_n = N                      # single full block (full dim: always legal)
    else:
        tile_n = max(8, (rows_target // 8) * 8)   # multiple of 8 sublanes
        if tile_n >= N:
            tile_n = N
    grid_n = pl.cdiv(N, tile_n)
    need_mask = (N % tile_n) != 0

    kernel = functools.partial(
        _loss2_kernel, n_rows=N, tile_n=tile_n, need_mask=need_mask
    )

    cost = pl.CostEstimate(
        flops=4 * N * D,                              # sub, mul, abs, add (+reduce)
        transcendentals=0,
        bytes_accessed=2 * N * D * itemsize + grid_n * 4,
    )

    partials = pl.pallas_call(
        kernel,
        out_shape=jax.ShapeDtypeStruct((grid_n, 1), jnp.float32),
        grid_spec=pltpu.PrefetchScalarGridSpec(
            num_scalar_prefetch=0,
            grid=(grid_n,),
            in_specs=[
                pl.BlockSpec((tile_n, D), lambda i: (i, 0)),
                pl.BlockSpec((tile_n, D), lambda i: (i, 0)),
            ],
            out_specs=pl.BlockSpec(
                (1, 1), lambda i: (i, 0), memory_space=pltpu.SMEM
            ),
        ),
        compiler_params=pltpu.CompilerParams(
            dimension_semantics=("parallel",),        # megacore-shardable on v7x
            vmem_limit_bytes=32 * 1024 * 1024,        # raise v5e's 16 MiB default
        ),
        cost_estimate=cost,
    )(t2, p2)

    # Tiny epilogue in XLA: combine per-block partials and apply mean over (B*T).
    return jnp.sum(partials) * jnp.float32(1.0 / N)


def loss2_ref(truth, pred):
    d = truth.astype(jnp.float32) - pred.astype(jnp.float32)
    mse = jnp.sum(d * d, axis=(2, 3, 4))
    mae = jnp.sum(jnp.abs(d), axis=(2, 3, 4))
    return jnp.mean(mse) + jnp.mean(mae)


if __name__ == "__main__":
    key = jax.random.PRNGKey(0)
    k1, k2, k3, k4 = jax.random.split(key, 4)

    # Main check: (B, T, C, H, W) f32, single full block path.
    shape = (2, 4, 4, 16, 16)
    truth = jax.random.normal(k1, shape, dtype=jnp.float32)
    pred = jax.random.normal(k2, shape, dtype=jnp.float32)
    loss = loss2_pallas(truth, pred)
    jax.block_until_ready(loss)
    ref = loss2_ref(truth, pred)
    assert jnp.allclose(loss, ref, rtol=1e-5, atol=1e-4), (loss, ref)

    # Second check: force multi-block grid + ragged-tail mask + bf16 inputs.
    shape2 = (3, 5, 4, 16, 16)          # N = 15, tile_n = 8 -> 2 blocks, masked tail
    truth2 = jax.random.normal(k3, shape2, dtype=jnp.float32).astype(jnp.bfloat16)
    pred2 = jax.random.normal(k4, shape2, dtype=jnp.float32).astype(jnp.bfloat16)
    loss2 = loss2_pallas(truth2, pred2, target_block_bytes=8 * 1024 * 8)
    jax.block_until_ready(loss2)
    ref2 = loss2_ref(truth2, pred2)
    assert jnp.allclose(loss2, ref2, rtol=1e-3, atol=1e-2), (loss2, ref2)

    print("KERNEL_OK")
</pallas_src>

<mosaic_0001>
module attributes {stable_mosaic.version = 11 : i64} {
  func.func @_loss2_kernel(%arg0: i32, %arg1: memref<8x1024xf32, #tpu.memory_space<vmem>>, %arg2: memref<8x1024xf32, #tpu.memory_space<vmem>>, %arg3: memref<1x1xf32, #tpu.memory_space<smem>>) attributes {dimension_semantics = [#tpu.dimension_semantics<parallel>], iteration_bounds = array<i64: 1>, scalar_prefetch = 0 : i64, scratch_operands = 0 : i64, tpu.core_type = #tpu.core_type<tc>, window_params = [{transform_indices = @transform_0, window_bounds = array<i64: 8, 1024>}, {transform_indices = @transform_1, window_bounds = array<i64: 8, 1024>}, {transform_indices = @transform_2, window_bounds = array<i64: 1, 1>}]} {
    %c0 = arith.constant 0 : index
    %c0_0 = arith.constant 0 : index
    %0 = vector.load %arg1[%c0, %c0_0] : memref<8x1024xf32, #tpu.memory_space<vmem>>, vector<8x1024xf32>
    %c0_1 = arith.constant 0 : index
    %c0_2 = arith.constant 0 : index
    %1 = vector.load %arg2[%c0_1, %c0_2] : memref<8x1024xf32, #tpu.memory_space<vmem>>, vector<8x1024xf32>
    %2 = arith.subf %0, %1 : vector<8x1024xf32>
    %3 = arith.mulf %2, %2 : vector<8x1024xf32>
    %4 = math.absf %2 : vector<8x1024xf32>
    %5 = arith.addf %3, %4 : vector<8x1024xf32>
    %6 = vector.shape_cast %5 : vector<8x1024xf32> to vector<1x8x1024xf32>
    %cst = arith.constant dense<0.000000e+00> : vector<1xf32>
    %7 = vector.multi_reduction <add>, %6, %cst [1, 2] : vector<1x8x1024xf32> to vector<1xf32>
    %8 = vector.shape_cast %7 : vector<1xf32> to vector<1x1x1xf32>
    %9 = vector.extract %8[0, 0, 0] : f32 from vector<1x1x1xf32>
    %c0_3 = arith.constant 0 : index
    %c0_4 = arith.constant 0 : index
    %10 = memref.load %arg3[%c0_3, %c0_4] : memref<1x1xf32, #tpu.memory_space<smem>>
    memref.store %9, %arg3[%c0_3, %c0_4] : memref<1x1xf32, #tpu.memory_space<smem>>
    return
  }
  func.func @transform_0(%arg0: i32) -> (i32, i32) {
    %c0_i32 = arith.constant 0 : i32
    %c0_i32_0 = arith.constant 0 : i32
    return %arg0, %c0_i32 : i32, i32
  }
  func.func @transform_1(%arg0: i32) -> (i32, i32) {
    %c0_i32 = arith.constant 0 : i32
    %c0_i32_0 = arith.constant 0 : i32
    return %arg0, %c0_i32 : i32, i32
  }
  func.func @transform_2(%arg0: i32) -> (i32, i32) {
    %c0_i32 = arith.constant 0 : i32
    %c0_i32_0 = arith.constant 0 : i32
    return %arg0, %c0_i32 : i32, i32
  }
}

</mosaic_0001>

<llo_original>
// kernel: tpu_custom_call.1
$region0: #{tpu_custom_call.1}
  #allocation0 [shape = 'u32[]', space=smem, size = 0x4, offset = 0x4, fixed_abs, tag = 'smem constant byte address 0x4 - core index']
  #allocation1 [shape = 'u32[144,128]{1,0:T(1,128)}', space=vmem, size = 0x12000, scoped, tag = 'internal scratch']
  %s0 = inlined_call_operand.hbm [shape: f32[8,1024], index: 0, kind: input, shape index: {}]
  %s1 = inlined_call_operand.hbm [shape: f32[8,1024], index: 1, kind: input, shape index: {}]
  %s2 = inlined_call_operand.hbm [shape: f32[1,1], index: 2, kind: output, shape index: {}]
  %s3 = sld [smem:[#allocation0]]
  $region26: #{tpu_custom_call.1} parent=0
    _
  %s5 = ssub.s32 1, %s3
  %s6 = scalar_select 0, %s5, %s3
  $region1: #{tpu_custom_call.1} parent=0
    #allocation2 [shape = 'u8[32768]{0}', space=vmem, size = 0x8000, scoped, tag = 'input window, operand 0, single buffered']
    #allocation3 [shape = 's32[1]{0}', space=sflag, size = 0x4, scoped, tag = 'scoped memory for tpu_custom_call.1']
    #allocation4 [shape = 's32[1]{0}', space=sflag, size = 0x4, scoped, tag = 'scoped memory for tpu_custom_call.1']
    #allocation5 [shape = 'u8[32768]{0}', space=vmem, size = 0x8000, scoped, tag = 'input window, operand 1, single buffered']
    #allocation6 [shape = 's32[1]{0}', space=sflag, size = 0x4, scoped, tag = 'scoped memory for tpu_custom_call.1']
    #allocation7 [shape = 'u8[512]{0}', space=smem, size = 0x200, scoped, tag = 'output window, operand 0, single buffered']
    %7 = vsyncpa [#allocation3], 0
    %8 = vsyncpa [#allocation6], 0
    %9 = vsyncpa [#allocation4], 0
    // Predicated region
    $region2: #{tpu_custom_call.1} parent=1 // pred_check
      _
    $region3: #{tpu_custom_call.1} parent=1 // pred_check_branch
      %11 = sbr.rel (0) target = $region5
    $region4: #{tpu_custom_call.1} parent=1 // pred_region
      %s13 = ssub.s32 1024, 1024
      %14 = vsyncadd [#allocation3], %s13
      %s16 = sshll.u32 [#allocation2], 4
      %s17 = int_to_ptr.vmem [resolvable:$true] %s16
      %19 = dma.hbm_to_vmem [thread:$0]  %s0, 1024, %s17, [#allocation3]
    $region5: #{tpu_custom_call.1} parent=1 // pred_fallthru
      _
    // Predicated region
    $region6: #{tpu_custom_call.1} parent=1 // pred_check
      _
    $region7: #{tpu_custom_call.1} parent=1 // pred_check_branch
      %21 = sbr.rel (0) target = $region9
    $region8: #{tpu_custom_call.1} parent=1 // pred_region
      %s23 = ssub.s32 1024, 1024
      %24 = vsyncadd [#allocation6], %s23
      %s26 = sshll.u32 [#allocation5], 4
      %s27 = int_to_ptr.vmem [resolvable:$true] %s26
      %29 = dma.hbm_to_vmem [thread:$0]  %s1, 1024, %s27, [#allocation6]
    $region9: #{tpu_custom_call.1} parent=1 // pred_fallthru
      _
    // Predicated region
    $region10: #{tpu_custom_call.1} parent=1 // pred_check
      _
    $region11: #{tpu_custom_call.1} parent=1 // pred_check_branch
      %31 = sbr.rel (0) target = $region13
    $region12: #{tpu_custom_call.1} parent=1 // pred_region
      %32 = dma.done [#allocation3], 1024
    $region13: #{tpu_custom_call.1} parent=1 // pred_fallthru
      _
    // Predicated region
    $region14: #{tpu_custom_call.1} parent=1 // pred_check
      _
    $region15: #{tpu_custom_call.1} parent=1 // pred_check_branch
      %34 = sbr.rel (0) target = $region17
    $region16: #{tpu_custom_call.1} parent=1 // pred_region
      %35 = dma.done [#allocation6], 1024
    $region17: #{tpu_custom_call.1} parent=1 // pred_fallthru
      _
    %v36 = vld [vmem:[#allocation2] sm:$0xff]
    %v37 = vld [vmem:[#allocation2 + $0x8] sm:$0xff]
    %v38 = vld [vmem:[#allocation2 + $0x10] sm:$0xff]
    %v39 = vld [vmem:[#allocation2 + $0x18] sm:$0xff]
    %v40 = vld [vmem:[#allocation2 + $0x20] sm:$0xff]
    %v41 = vld [vmem:[#allocation2 + $0x28] sm:$0xff]
    %v42 = vld [vmem:[#allocation2 + $0x30] sm:$0xff]
    %v43 = vld [vmem:[#allocation2 + $0x38] sm:$0xff]
    %v44 = vld [vmem:[#allocation5] sm:$0xff]
    %v45 = vld [vmem:[#allocation5 + $0x8] sm:$0xff]
    %v46 = vld [vmem:[#allocation5 + $0x10] sm:$0xff]
    %v47 = vld [vmem:[#allocation5 + $0x18] sm:$0xff]
    %v48 = vld [vmem:[#allocation5 + $0x20] sm:$0xff]
    %v49 = vld [vmem:[#allocation5 + $0x28] sm:$0xff]
    %v50 = vld [vmem:[#allocation5 + $0x30] sm:$0xff]
    %v51 = vld [vmem:[#allocation5 + $0x38] sm:$0xff]
    %v52 = vsub.f32 %v36, %v44
    %v53 = vsub.f32 %v37, %v45
    %v54 = vsub.f32 %v38, %v46
    %v55 = vsub.f32 %v39, %v47
    %v56 = vsub.f32 %v40, %v48
    %v57 = vsub.f32 %v41, %v49
    %v58 = vsub.f32 %v42, %v50
    %v59 = vsub.f32 %v43, %v51
    %v60 = vmul.f32 %v52, %v52
    %v61 = vmul.f32 %v53, %v53
    %v62 = vmul.f32 %v54, %v54
    %v63 = vmul.f32 %v55, %v55
    %v64 = vmul.f32 %v56, %v56
    %v65 = vmul.f32 %v57, %v57
    %v66 = vmul.f32 %v58, %v58
    %v67 = vmul.f32 %v59, %v59
    %v68 = vand.u32 2147483647, %v52
    %v69 = vand.u32 2147483647, %v53
    %v70 = vand.u32 2147483647, %v54
    %v71 = vand.u32 2147483647, %v55
    %v72 = vand.u32 2147483647, %v56
    %v73 = vand.u32 2147483647, %v57
    %v74 = vand.u32 2147483647, %v58
    %v75 = vand.u32 2147483647, %v59
    %v76 = vadd.f32 %v60, %v68
    %v77 = vadd.f32 %v61, %v69
    %v78 = vadd.f32 %v62, %v70
    %v79 = vadd.f32 %v63, %v71
    %v80 = vadd.f32 %v64, %v72
    %v81 = vadd.f32 %v65, %v73
    %v82 = vadd.f32 %v66, %v74
    %v83 = vadd.f32 %v67, %v75
    %v84 = vadd.f32 %v76, %v77
    %v85 = vadd.f32 %v84, %v78
    %v86 = vadd.f32 %v85, %v79
    %v87 = vadd.f32 %v86, %v80
    %v88 = vadd.f32 %v87, %v81
    %v89 = vadd.f32 %v88, %v82
    %v90 = vadd.f32 %v89, %v83
    %91 = vadd.xlane.f32.xlu0 %v90
    %v92 = vpop.xlane.xlu0 %91
    %v93 = vrot.slane %v92, 4
    %v94 = vadd.f32 %v92, %v93
    %v95 = vrot.slane %v94, 2
    %v96 = vadd.f32 %v94, %v95
    %v97 = vrot.slane %v96, 1
    %v98 = vadd.f32 %v96, %v97
    %s99 = vtos %v98
    %s100 = scalar_lea.smem [#allocation7], 0
    %101 = sst [smem:[%s100]] %s99
    // Predicated region
    $region18: #{tpu_custom_call.1} parent=1 // pred_check
      _
    $region19: #{tpu_custom_call.1} parent=1 // pred_check_branch
      %103 = sbr.rel (0) target = $region21
    $region20: #{tpu_custom_call.1} parent=1 // pred_region
      %s105 = ssub.s32 16, 16
      %106 = vsyncadd [#allocation4], %s105
      %109 = dma.smem_to_hbm [#allocation7], 16, %s2, [#allocation4]
    $region21: #{tpu_custom_call.1} parent=1 // pred_fallthru
      _
    // Predicated region
    $region22: #{tpu_custom_call.1} parent=1 // pred_check
      _
    $region23: #{tpu_custom_call.1} parent=1 // pred_check_branch
      %111 = sbr.rel (0) target = $region25
    $region24: #{tpu_custom_call.1} parent=1 // pred_region
      %112 = dma.done [#allocation4], 16
    $region25: #{tpu_custom_call.1} parent=1 // pred_fallthru
      _
    %113 = sfence
    %114 = vsyncpa [#allocation3], 1
    %115 = vsyncpa [#allocation6], 1
    %116 = vsyncpa [#allocation4], 1

</llo_original>
